<compile_context>
chip_gen: v6e
topology: v6e:2x2x1
jax: 0.10.0
libtpu: 0.0.40
codegen_flags: <defaults>
</compile_context>

<pallas_src>
import functools

import jax
import jax.numpy as jnp
from jax.experimental import pallas as pl
from jax.experimental.pallas import tpu as pltpu


_LANE = 128


def _round_up(n, m):
    return ((n + m - 1) // m) * m


def _budgets():
    """Generation-aware VMEM budgets (v7x has 64 MiB/TC, v5e/v6e have 128 MiB)."""
    try:
        cap = int(pltpu.get_tpu_info().vmem_capacity_bytes)
    except Exception:
        cap = 64 << 20  # conservative default (v7x)
    if cap >= (128 << 20):  # v5e / v6e
        return {"fused_slab": 24 << 20, "split_block": 8 << 20,
                "block_target": 8 << 20, "vmem_cap": 96 << 20}
    return {"fused_slab": 8 << 20, "split_block": 4 << 20,
            "block_target": 4 << 20, "vmem_cap": 48 << 20}


# ---------------------------------------------------------------------------
# Fused path: one grid step per batch-block, full (Bt, C, HW) slab resident.
# ---------------------------------------------------------------------------
def _se_fused_kernel(x_ref, w1_ref, w2_ref, o_ref):
    # x_ref : (Bt, C, HW) in VMEM
    # w1_ref: (C, Cr)  fc1 weight transposed, pre-scaled by 1/HW
    # w2_ref: (Cr, C)  fc2 weight transposed
    y = jnp.sum(x_ref[...].astype(jnp.float32), axis=-1)              # (Bt, C) f32 accum
    h = jnp.maximum(jnp.dot(y, w1_ref[...],
                            preferred_element_type=jnp.float32), 0.0)  # (Bt, Cr)
    z = jnp.dot(h, w2_ref[...], preferred_element_type=jnp.float32)    # (Bt, C)
    s = jax.nn.sigmoid(z).astype(x_ref.dtype)                          # EUP, cast once
    # Re-read x_ref here (don't keep the whole slab live across the reduce).
    o_ref[...] = (x_ref[...] * s[:, :, None]).astype(o_ref.dtype)


# ---------------------------------------------------------------------------
# Split path, kernel A: squeeze (tiled sum over HW) + excitation -> s=(B, C, 1)
# ---------------------------------------------------------------------------
def _squeeze_excite_kernel(x_ref, w1_ref, w2_ref, s_ref, acc_ref, *, hw_total):
    t = pl.program_id(1)

    @pl.when(t == 0)
    def _():
        acc_ref[...] = jnp.zeros_like(acc_ref)

    hw_tile = x_ref.shape[-1]
    x = x_ref[...]
    if hw_total % hw_tile != 0:
        # Ragged last tile: mask out-of-range lanes (block padding is garbage).
        lane = jax.lax.broadcasted_iota(jnp.int32, x_ref.shape, dimension=2)
        valid = (t * hw_tile + lane) < hw_total
        x = jnp.where(valid, x, jnp.zeros_like(x))
    acc_ref[...] += jnp.sum(x.astype(jnp.float32), axis=-1)            # (1, C) f32 partials

    @pl.when(t == pl.num_programs(1) - 1)
    def _():
        y = acc_ref[...]                                               # w1 carries 1/HW
        h = jnp.maximum(jnp.dot(y, w1_ref[...],
                                preferred_element_type=jnp.float32), 0.0)
        z = jnp.dot(h, w2_ref[...], preferred_element_type=jnp.float32)
        s_ref[...] = jax.nn.sigmoid(z)[:, :, None].astype(s_ref.dtype)


# ---------------------------------------------------------------------------
# Split path, kernel B: elementwise scale x * s (pipelined over B and HW tiles)
# ---------------------------------------------------------------------------
def _scale_kernel(x_ref, s_ref, o_ref):
    o_ref[...] = (x_ref[...] * s_ref[...]).astype(o_ref.dtype)


def se_block(x, w1_t, w2_t, *, force_split=False, split_hw_tile=None,
             batch_block=None, donate_x=False):
    """SE block forward. x: (B, C, H, W); w1_t: (C, C//ratio); w2_t: (C//ratio, C)."""
    B, C, H, W = x.shape
    HW = H * W
    Cr = w1_t.shape[1]
    itemsize = x.dtype.itemsize
    budgets = _budgets()

    # Fold the 1/HW of the global average pool into fc1's weight: the kernels
    # then only do a lane-axis sum (XLU) + MXU matmul, no VPU divide.
    w1_scaled = w1_t.astype(jnp.float32) * (1.0 / HW)
    w2f = w2_t.astype(jnp.float32)
    weight_bytes = (w1_scaled.size + w2f.size) * 4

    x3 = x.reshape(B, C, HW)                 # no padding, no extra HBM copies
    per_batch_bytes = C * HW * itemsize
    use_fused = (not force_split) and per_batch_bytes <= budgets["fused_slab"]

    if use_fused:
        # ---- fused single pass: 1 read + 1 write of x -----------------------
        if batch_block is not None:
            bt = max(1, min(B, int(batch_block)))
        else:
            bt = max(1, min(B, budgets["block_target"] // max(per_batch_bytes, 1)))
        nb = pl.cdiv(B, bt)

        block_bytes = bt * per_batch_bytes
        vmem_need = 4 * block_bytes + 4 * weight_bytes + (2 << 20)
        vmem_limit = int(min(max(vmem_need, 32 << 20), budgets["vmem_cap"]))

        out3 = pl.pallas_call(
            _se_fused_kernel,
            out_shape=jax.ShapeDtypeStruct((B, C, HW), x.dtype),
            grid_spec=pltpu.PrefetchScalarGridSpec(
                num_scalar_prefetch=0,
                grid=(nb,),
                in_specs=[
                    pl.BlockSpec((bt, C, HW), lambda b: (b, 0, 0)),
                    pl.BlockSpec((C, Cr), lambda b: (0, 0)),   # weights stay VMEM-resident
                    pl.BlockSpec((Cr, C), lambda b: (0, 0)),
                ],
                out_specs=pl.BlockSpec((bt, C, HW), lambda b: (b, 0, 0)),
            ),
            compiler_params=pltpu.CompilerParams(
                dimension_semantics=("parallel",),
                vmem_limit_bytes=vmem_limit,
            ),
            input_output_aliases=({0: 0} if donate_x else {}),
        )(x3, w1_scaled, w2f)
        return out3.reshape(B, C, H, W)

    # ---- split path: (A) squeeze+excite -> s, (B) elementwise scale ---------
    if split_hw_tile is not None:
        hw_tile = _round_up(split_hw_tile, _LANE)
    else:
        hw_tile = max(_LANE,
                      (budgets["split_block"] // max(C * itemsize, 1)) // _LANE * _LANE)
    if hw_tile >= HW:
        hw_tile = HW          # full-dim block: valid regardless of 128-divisibility
    n_hw = pl.cdiv(HW, hw_tile)

    block_bytes = C * hw_tile * itemsize
    vmem_limit = int(min(max(4 * block_bytes + 4 * weight_bytes + (4 << 20), 32 << 20),
                         budgets["vmem_cap"]))

    # Kernel A: s = sigmoid(relu(mean(x) @ W1) @ W2), shape (B, C, 1), x.dtype
    s = pl.pallas_call(
        functools.partial(_squeeze_excite_kernel, hw_total=HW),
        out_shape=jax.ShapeDtypeStruct((B, C, 1), x.dtype),
        grid_spec=pltpu.PrefetchScalarGridSpec(
            num_scalar_prefetch=0,
            grid=(B, n_hw),
            in_specs=[
                pl.BlockSpec((1, C, hw_tile), lambda b, t: (b, 0, t)),
                pl.BlockSpec((C, Cr), lambda b, t: (0, 0)),
                pl.BlockSpec((Cr, C), lambda b, t: (0, 0)),
            ],
            out_specs=pl.BlockSpec((1, C, 1), lambda b, t: (b, 0, 0)),
            scratch_shapes=[pltpu.VMEM((1, C), jnp.float32)],
        ),
        compiler_params=pltpu.CompilerParams(
            dimension_semantics=("parallel", "arbitrary"),
            vmem_limit_bytes=vmem_limit,
        ),
    )(x3, w1_scaled, w2f)

    # Kernel B: out = x * s (pure elementwise, fully pipelined, lane-dense)
    out3 = pl.pallas_call(
        _scale_kernel,
        out_shape=jax.ShapeDtypeStruct((B, C, HW), x.dtype),
        grid_spec=pltpu.PrefetchScalarGridSpec(
            num_scalar_prefetch=0,
            grid=(B, n_hw),
            in_specs=[
                pl.BlockSpec((1, C, hw_tile), lambda b, t: (b, 0, t)),
                pl.BlockSpec((1, C, 1), lambda b, t: (b, 0, 0)),
            ],
            out_specs=pl.BlockSpec((1, C, hw_tile), lambda b, t: (b, 0, t)),
        ),
        compiler_params=pltpu.CompilerParams(
            dimension_semantics=("parallel", "parallel"),
            vmem_limit_bytes=vmem_limit,
        ),
    )(x3, s)
    return out3.reshape(B, C, H, W)


def init_se_params(key, channel, ratio=16):
    """Deterministic init matching nn.Linear default bounds (bias=False)."""
    cr = channel // ratio
    k1, k2 = jax.random.split(key)
    # PyTorch fc1.weight: (cr, channel), fc2.weight: (channel, cr).
    # We store the transposes so the kernels can do plain y @ W.
    bound1 = 1.0 / jnp.sqrt(channel)
    bound2 = 1.0 / jnp.sqrt(cr)
    w1_t = jax.random.uniform(k1, (channel, cr), jnp.float32, -bound1, bound1)
    w2_t = jax.random.uniform(k2, (cr, channel), jnp.float32, -bound2, bound2)
    return w1_t, w2_t


def se_block_ref(x, w1_t, w2_t):
    """Pure-JAX reference for correctness check."""
    y = jnp.mean(x, axis=(2, 3))                      # (B, C)
    h = jnp.maximum(y @ w1_t, 0.0)                    # (B, Cr)
    s = jax.nn.sigmoid(h @ w2_t)                      # (B, C)
    return x * s[:, :, None, None]


if __name__ == "__main__":
    key = jax.random.PRNGKey(0)
    kx1, kx2, kp = jax.random.split(key, 3)
    ratio = 16

    # Case 1: fused path, lane-aligned HW (B=2, C=64, H=W=16 -> HW=256, hidden=4).
    B, C, H, W = 2, 64, 16, 16
    x = jax.random.normal(kx1, (B, C, H, W), dtype=jnp.float32)
    w1_t, w2_t = init_se_params(kp, C, ratio)
    ref = se_block_ref(x, w1_t, w2_t)
    out = jax.block_until_ready(se_block(x, w1_t, w2_t))
    assert out.shape == (B, C, H, W)
    assert jnp.allclose(out, ref, atol=1e-5, rtol=1e-5), "fused path mismatch"

    # Case 2: fused path, non-128-multiple HW (7x7) and a batch block that does
    # not divide B (ragged last batch block -> OOB stores dropped). No host pad.
    B2, H2, W2 = 3, 7, 7
    x2 = jax.random.normal(kx2, (B2, C, H2, W2), dtype=jnp.float32)
    ref2 = se_block_ref(x2, w1_t, w2_t)
    out2 = jax.block_until_ready(se_block(x2, w1_t, w2_t, batch_block=2))
    assert jnp.allclose(out2, ref2, atol=1e-5, rtol=1e-5), "fused ragged-HW mismatch"

    # Case 3: split path with a ragged last HW tile (HW=144, tile=128), no host pad.
    B3, H3, W3 = 2, 12, 12
    x3 = jax.random.normal(kx1, (B3, C, H3, W3), dtype=jnp.float32)
    ref3 = se_block_ref(x3, w1_t, w2_t)
    out3 = jax.block_until_ready(
        se_block(x3, w1_t, w2_t, force_split=True, split_hw_tile=128))
    assert jnp.allclose(out3, ref3, atol=1e-5, rtol=1e-5), "split path mismatch"

    print("KERNEL_OK")
</pallas_src>

<mosaic_0001>
module attributes {stable_mosaic.version = 11 : i64} {
  func.func @_se_fused_kernel(%arg0: i32, %arg1: memref<2x64x256xf32, #tpu.memory_space<vmem>>, %arg2: memref<64x4xf32, #tpu.memory_space<vmem>>, %arg3: memref<4x64xf32, #tpu.memory_space<vmem>>, %arg4: memref<2x64x256xf32, #tpu.memory_space<vmem>>) attributes {dimension_semantics = [#tpu.dimension_semantics<parallel>], iteration_bounds = array<i64: 1>, scalar_prefetch = 0 : i64, scratch_operands = 0 : i64, tpu.core_type = #tpu.core_type<tc>, window_params = [{transform_indices = @transform_0, window_bounds = array<i64: 2, 64, 256>}, {pipeline_mode = #tpu.pipeline_mode<synchronous>, transform_indices = @transform_1, window_bounds = array<i64: 64, 4>}, {pipeline_mode = #tpu.pipeline_mode<synchronous>, transform_indices = @transform_2, window_bounds = array<i64: 4, 64>}, {transform_indices = @transform_3, window_bounds = array<i64: 2, 64, 256>}]} {
    %c0 = arith.constant 0 : index
    %c0_0 = arith.constant 0 : index
    %c0_1 = arith.constant 0 : index
    %0 = vector.load %arg1[%c0, %c0_0, %c0_1] : memref<2x64x256xf32, #tpu.memory_space<vmem>>, vector<2x64x256xf32>
    %cst = arith.constant dense<0.000000e+00> : vector<2x64xf32>
    %1 = vector.multi_reduction <add>, %0, %cst [2] : vector<2x64x256xf32> to vector<2x64xf32>
    %c0_2 = arith.constant 0 : index
    %c0_3 = arith.constant 0 : index
    %2 = vector.load %arg2[%c0_2, %c0_3] : memref<64x4xf32, #tpu.memory_space<vmem>>, vector<64x4xf32>
    %cst_4 = arith.constant dense<0.000000e+00> : vector<2x4xf32>
    %3 = tpu.matmul %1, %2, %cst_4 {dimension_numbers = #tpu.dot_dimension_numbers<[1], [0], [0], [1], [0, 0, 1, 1], [], []>} : vector<2x64xf32>, vector<64x4xf32>, vector<2x4xf32> -> vector<2x4xf32>
    %cst_5 = arith.constant 0.000000e+00 : f32
    %4 = vector.broadcast %cst_5 : f32 to vector<2x4xf32>
    %5 = arith.maximumf %3, %4 : vector<2x4xf32>
    %c0_6 = arith.constant 0 : index
    %c0_7 = arith.constant 0 : index
    %6 = vector.load %arg3[%c0_6, %c0_7] : memref<4x64xf32, #tpu.memory_space<vmem>>, vector<4x64xf32>
    %cst_8 = arith.constant dense<0.000000e+00> : vector<2x64xf32>
    %7 = tpu.matmul %5, %6, %cst_8 {dimension_numbers = #tpu.dot_dimension_numbers<[1], [0], [0], [1], [0, 0, 1, 1], [], []>} : vector<2x4xf32>, vector<4x64xf32>, vector<2x64xf32> -> vector<2x64xf32>
    %8 = arith.negf %7 : vector<2x64xf32>
    %9 = math.exp %8 : vector<2x64xf32>
    %cst_9 = arith.constant 1.000000e+00 : f32
    %10 = vector.broadcast %cst_9 : f32 to vector<2x64xf32>
    %11 = arith.addf %10, %9 : vector<2x64xf32>
    %12 = arith.divf %10, %11 : vector<2x64xf32>
    %c0_10 = arith.constant 0 : index
    %c0_11 = arith.constant 0 : index
    %c0_12 = arith.constant 0 : index
    %13 = vector.load %arg1[%c0_10, %c0_11, %c0_12] : memref<2x64x256xf32, #tpu.memory_space<vmem>>, vector<2x64x256xf32>
    %14 = vector.shape_cast %12 : vector<2x64xf32> to vector<2x64x1xf32>
    %15 = vector.broadcast %14 : vector<2x64x1xf32> to vector<2x64x256xf32>
    %16 = arith.mulf %13, %15 : vector<2x64x256xf32>
    %c0_13 = arith.constant 0 : index
    %c0_14 = arith.constant 0 : index
    %c0_15 = arith.constant 0 : index
    %17 = vector.load %arg4[%c0_13, %c0_14, %c0_15] : memref<2x64x256xf32, #tpu.memory_space<vmem>>, vector<2x64x256xf32>
    tpu.vector_store %arg4[%c0_13, %c0_14, %c0_15], %16 {strides = array<i32>} : memref<2x64x256xf32, #tpu.memory_space<vmem>>, vector<2x64x256xf32>,
    return
  }
  func.func @transform_0(%arg0: i32) -> (i32, i32, i32) {
    %c0_i32 = arith.constant 0 : i32
    %c0_i32_0 = arith.constant 0 : i32
    %c0_i32_1 = arith.constant 0 : i32
    return %arg0, %c0_i32, %c0_i32_0 : i32, i32, i32
  }
  func.func @transform_1(%arg0: i32) -> (i32, i32) {
    %c0_i32 = arith.constant 0 : i32
    %c0_i32_0 = arith.constant 0 : i32
    %c0_i32_1 = arith.constant 0 : i32
    return %c0_i32, %c0_i32_0 : i32, i32
  }
  func.func @transform_2(%arg0: i32) -> (i32, i32) {
    %c0_i32 = arith.constant 0 : i32
    %c0_i32_0 = arith.constant 0 : i32
    %c0_i32_1 = arith.constant 0 : i32
    return %c0_i32, %c0_i32_0 : i32, i32
  }
  func.func @transform_3(%arg0: i32) -> (i32, i32, i32) {
    %c0_i32 = arith.constant 0 : i32
    %c0_i32_0 = arith.constant 0 : i32
    %c0_i32_1 = arith.constant 0 : i32
    return %arg0, %c0_i32, %c0_i32_0 : i32, i32, i32
  }
}

</mosaic_0001>

<llo_original>
// kernel: tpu_custom_call.1
$region0: #{tpu_custom_call.1}
  #allocation0 [shape = 'u32[]', space=smem, size = 0x4, offset = 0x4, fixed_abs, tag = 'smem constant byte address 0x4 - core index']
  #allocation1 [shape = 'u32[144,128]{1,0:T(1,128)}', space=vmem, size = 0x12000, scoped, tag = 'internal scratch']
  %s0 = inlined_call_operand.hbm [shape: f32[2,64,256], index: 0, kind: input, shape index: {}]
  %s1 = inlined_call_operand.vmem [shape: f32[64,4], index: 1, kind: input, shape index: {}]
  %s2 = inlined_call_operand.vmem [shape: f32[4,64], index: 2, kind: input, shape index: {}]
  %s3 = inlined_call_operand.hbm [shape: f32[2,64,256], index: 3, kind: output, shape index: {}]
  %s4 = sld [smem:[#allocation0]]
  $region26: #{tpu_custom_call.1} parent=0
    _
  %s6 = ssub.s32 1, %s4
  %s7 = scalar_select 0, %s6, %s4
  $region1: #{tpu_custom_call.1} parent=0
    #allocation2 [shape = 'u8[131072]{0}', space=vmem, size = 0x20000, scoped, tag = 'input window, operand 0, single buffered']
    #allocation3 [shape = 's32[1]{0}', space=sflag, size = 0x4, scoped, tag = 'scoped memory for tpu_custom_call.1']
    #allocation4 [shape = 's32[1]{0}', space=sflag, size = 0x4, scoped, tag = 'scoped memory for tpu_custom_call.1']
    #allocation5 [shape = 'u8[131072]{0}', space=vmem, size = 0x20000, scoped, tag = 'output window, operand 0, single buffered']
    %8 = vsyncpa [#allocation3], 0
    %9 = vsyncpa [#allocation4], 0
    // Predicated region
    $region2: #{tpu_custom_call.1} parent=1 // pred_check
      _
    $region3: #{tpu_custom_call.1} parent=1 // pred_check_branch
      %11 = sbr.rel (0) target = $region5
    $region4: #{tpu_custom_call.1} parent=1 // pred_region
      %s13 = ssub.s32 4096, 4096
      %14 = vsyncadd [#allocation3], %s13
      %s15 = sshll.u32 [#allocation2], 4
      %s16 = int_to_ptr.vmem [resolvable:$true] %s15
      %21 = dma.hbm_to_vmem [thread:$0]  %s0, 4096, %s16, [#allocation3], 256, 256, 16
    $region5: #{tpu_custom_call.1} parent=1 // pred_fallthru
      _
    // Predicated region
    $region6: #{tpu_custom_call.1} parent=1 // pred_check
      _
    $region7: #{tpu_custom_call.1} parent=1 // pred_check_branch
      %23 = sbr.rel (0) target = $region9
    $region8: #{tpu_custom_call.1} parent=1 // pred_region
      _
    $region9: #{tpu_custom_call.1} parent=1 // pred_fallthru
      _
    // Predicated region
    $region10: #{tpu_custom_call.1} parent=1 // pred_check
      _
    $region11: #{tpu_custom_call.1} parent=1 // pred_check_branch
      %25 = sbr.rel (0) target = $region13
    $region12: #{tpu_custom_call.1} parent=1 // pred_region
      _
    $region13: #{tpu_custom_call.1} parent=1 // pred_fallthru
      _
    // Predicated region
    $region14: #{tpu_custom_call.1} parent=1 // pred_check
      _
    $region15: #{tpu_custom_call.1} parent=1 // pred_check_branch
      %27 = sbr.rel (0) target = $region17
    $region16: #{tpu_custom_call.1} parent=1 // pred_region
      %28 = dma.done [#allocation3], 4096
    $region17: #{tpu_custom_call.1} parent=1 // pred_fallthru
      _
    %v29 = vld [vmem:[#allocation2] sm:$0xff]
    %v30 = vld [vmem:[#allocation2 + $0x8] sm:$0xff]
    %v31 = vld [vmem:[#allocation2 + $0x10] sm:$0xff]
    %v32 = vld [vmem:[#allocation2 + $0x18] sm:$0xff]
    %v33 = vld [vmem:[#allocation2 + $0x20] sm:$0xff]
    %v34 = vld [vmem:[#allocation2 + $0x28] sm:$0xff]
    %v35 = vld [vmem:[#allocation2 + $0x30] sm:$0xff]
    %v36 = vld [vmem:[#allocation2 + $0x38] sm:$0xff]
    %v37 = vld [vmem:[#allocation2 + $0x40] sm:$0xff]
    %v38 = vld [vmem:[#allocation2 + $0x48] sm:$0xff]
    %v39 = vld [vmem:[#allocation2 + $0x50] sm:$0xff]
    %v40 = vld [vmem:[#allocation2 + $0x58] sm:$0xff]
    %v41 = vld [vmem:[#allocation2 + $0x60] sm:$0xff]
    %v42 = vld [vmem:[#allocation2 + $0x68] sm:$0xff]
    %v43 = vld [vmem:[#allocation2 + $0x70] sm:$0xff]
    %v44 = vld [vmem:[#allocation2 + $0x78] sm:$0xff]
    %v45 = vld [vmem:[#allocation2 + $0x80] sm:$0xff]
    %v46 = vld [vmem:[#allocation2 + $0x88] sm:$0xff]
    %v47 = vld [vmem:[#allocation2 + $0x90] sm:$0xff]
    %v48 = vld [vmem:[#allocation2 + $0x98] sm:$0xff]
    %v49 = vld [vmem:[#allocation2 + $0xa0] sm:$0xff]
    %v50 = vld [vmem:[#allocation2 + $0xa8] sm:$0xff]
    %v51 = vld [vmem:[#allocation2 + $0xb0] sm:$0xff]
    %v52 = vld [vmem:[#allocation2 + $0xb8] sm:$0xff]
    %v53 = vld [vmem:[#allocation2 + $0xc0] sm:$0xff]
    %v54 = vld [vmem:[#allocation2 + $0xc8] sm:$0xff]
    %v55 = vld [vmem:[#allocation2 + $0xd0] sm:$0xff]
    %v56 = vld [vmem:[#allocation2 + $0xd8] sm:$0xff]
    %v57 = vld [vmem:[#allocation2 + $0xe0] sm:$0xff]
    %v58 = vld [vmem:[#allocation2 + $0xe8] sm:$0xff]
    %v59 = vld [vmem:[#allocation2 + $0xf0] sm:$0xff]
    %v60 = vld [vmem:[#allocation2 + $0xf8] sm:$0xff]
    %v61 = vadd.f32 %v29, %v30
    %62 = vadd.xlane.f32.xlu0 %v61
    %v63 = vpop.xlane.xlu0 %62
    %v64 = vadd.f32 %v31, %v32
    %65 = vadd.xlane.f32.xlu0 %v64
    %v66 = vpop.xlane.xlu0 %65
    %v67 = vadd.f32 %v33, %v34
    %68 = vadd.xlane.f32.xlu0 %v67
    %v69 = vpop.xlane.xlu0 %68
    %v70 = vadd.f32 %v35, %v36
    %71 = vadd.xlane.f32.xlu0 %v70
    %v72 = vpop.xlane.xlu0 %71
    %v73 = vadd.f32 %v37, %v38
    %74 = vadd.xlane.f32.xlu0 %v73
    %v75 = vpop.xlane.xlu0 %74
    %v76 = vadd.f32 %v39, %v40
    %77 = vadd.xlane.f32.xlu0 %v76
    %v78 = vpop.xlane.xlu0 %77
    %v79 = vadd.f32 %v41, %v42
    %80 = vadd.xlane.f32.xlu0 %v79
    %v81 = vpop.xlane.xlu0 %80
    %v82 = vadd.f32 %v43, %v44
    %83 = vadd.xlane.f32.xlu0 %v82
    %v84 = vpop.xlane.xlu0 %83
    %v85 = vadd.f32 %v45, %v46
    %86 = vadd.xlane.f32.xlu0 %v85
    %v87 = vpop.xlane.xlu0 %86
    %v88 = vadd.f32 %v47, %v48
    %89 = vadd.xlane.f32.xlu0 %v88
    %v90 = vpop.xlane.xlu0 %89
    %v91 = vadd.f32 %v49, %v50
    %92 = vadd.xlane.f32.xlu0 %v91
    %v93 = vpop.xlane.xlu0 %92
    %v94 = vadd.f32 %v51, %v52
    %95 = vadd.xlane.f32.xlu0 %v94
    %v96 = vpop.xlane.xlu0 %95
    %v97 = vadd.f32 %v53, %v54
    %98 = vadd.xlane.f32.xlu0 %v97
    %v99 = vpop.xlane.xlu0 %98
    %v100 = vadd.f32 %v55, %v56
    %101 = vadd.xlane.f32.xlu0 %v100
    %v102 = vpop.xlane.xlu0 %101
    %v103 = vadd.f32 %v57, %v58
    %104 = vadd.xlane.f32.xlu0 %v103
    %v105 = vpop.xlane.xlu0 %104
    %v106 = vadd.f32 %v59, %v60
    %107 = vadd.xlane.f32.xlu0 %v106
    %v108 = vpop.xlane.xlu0 %107
    %v109 = vld [vmem:[%s1] sm:$0xff]
    %v110 = vld [vmem:[%s1 + $0x8] sm:$0xff]
    %v111 = vld [vmem:[%s1 + $0x10] sm:$0xff]
    %v112 = vld [vmem:[%s1 + $0x18] sm:$0xff]
    %v113 = vld [vmem:[%s1 + $0x20] sm:$0xff]
    %v114 = vld [vmem:[%s1 + $0x28] sm:$0xff]
    %v115 = vld [vmem:[%s1 + $0x30] sm:$0xff]
    %v116 = vld [vmem:[%s1 + $0x38] sm:$0xff]
    %v133 = vlaneseq
    %v134 = vand.u32 %v133, 127
    %v135 = vlaneseq
    %v136 = vshrl.u32 %v135, 7
    %v137 = vsub.s32 %v134, %v136
    %v138 = vrot.slane %v63, %v137
    %v139 = vadd.s32 %v134, 4294967288
    %v140 = vlaneseq
    %v141 = vshrl.u32 %v140, 7
    %v142 = vsub.s32 %v139, %v141
    %v143 = vrot.slane %v66, %v142
    %vm144 = vcmask 130112
    %v145 = vsel %vm144, %v143, %v138
    %v146 = vadd.s32 %v134, 4294967280
    %v147 = vlaneseq
    %v148 = vshrl.u32 %v147, 7
    %v149 = vsub.s32 %v146, %v148
    %v150 = vrot.slane %v69, %v149
    %vm151 = vcmask 195712
    %v152 = vsel %vm151, %v150, %v145
    %v153 = vadd.s32 %v134, 4294967272
    %v154 = vlaneseq
    %v155 = vshrl.u32 %v154, 7
    %v156 = vsub.s32 %v153, %v155
    %v157 = vrot.slane %v72, %v156
    %vm158 = vcmask 261312
    %v159 = vsel %vm158, %v157, %v152
    %v160 = vadd.s32 %v134, 4294967264
    %v161 = vlaneseq
    %v162 = vshrl.u32 %v161, 7
    %v163 = vsub.s32 %v160, %v162
    %v164 = vrot.slane %v75, %v163
    %vm165 = vcmask 326912
    %v166 = vsel %vm165, %v164, %v159
    %v167 = vadd.s32 %v134, 4294967256
    %v168 = vlaneseq
    %v169 = vshrl.u32 %v168, 7
    %v170 = vsub.s32 %v167, %v169
    %v171 = vrot.slane %v78, %v170
    %vm172 = vcmask 392512
    %v173 = vsel %vm172, %v171, %v166
    %v174 = vadd.s32 %v134, 4294967248
    %v175 = vlaneseq
    %v176 = vshrl.u32 %v175, 7
    %v177 = vsub.s32 %v174, %v176
    %v178 = vrot.slane %v81, %v177
    %vm179 = vcmask 458112
    %v180 = vsel %vm179, %v178, %v173
    %v181 = vadd.s32 %v134, 4294967240
    %v182 = vlaneseq
    %v183 = vshrl.u32 %v182, 7
    %v184 = vsub.s32 %v181, %v183
    %v185 = vrot.slane %v84, %v184
    %vm186 = vcmask 523712
    %v187 = vsel %vm186, %v185, %v180
    %v188 = vlaneseq
    %v189 = vshrl.u32 %v188, 7
    %v190 = vsub.s32 %v134, %v189
    %v191 = vrot.slane %v87, %v190
    %v192 = vlaneseq
    %v193 = vshrl.u32 %v192, 7
    %v194 = vsub.s32 %v139, %v193
    %v195 = vrot.slane %v90, %v194
    %v196 = vsel %vm144, %v195, %v191
    %v197 = vlaneseq
    %v198 = vshrl.u32 %v197, 7
    %v199 = vsub.s32 %v146, %v198
    %v200 = vrot.slane %v93, %v199
    %v201 = vsel %vm151, %v200, %v196
    %v202 = vlaneseq
    %v203 = vshrl.u32 %v202, 7
    %v204 = vsub.s32 %v153, %v203
    %v205 = vrot.slane %v96, %v204
    %v206 = vsel %vm158, %v205, %v201
    %v207 = vlaneseq
    %v208 = vshrl.u32 %v207, 7
    %v209 = vsub.s32 %v160, %v208
    %v210 = vrot.slane %v99, %v209
    %v211 = vsel %vm165, %v210, %v206
    %v212 = vlaneseq
    %v213 = vshrl.u32 %v212, 7
    %v214 = vsub.s32 %v167, %v213
    %v215 = vrot.slane %v102, %v214
    %v216 = vsel %vm172, %v215, %v211
    %v217 = vlaneseq
    %v218 = vshrl.u32 %v217, 7
    %v219 = vsub.s32 %v174, %v218
    %v220 = vrot.slane %v105, %v219
    %v221 = vsel %vm179, %v220, %v216
    %v222 = vlaneseq
    %v223 = vshrl.u32 %v222, 7
    %v224 = vsub.s32 %v181, %v223
    %v225 = vrot.slane %v108, %v224
    %v226 = vsel %vm186, %v225, %v221
    %vm227 = vcmask 1041409
    %v228 = vsel %vm227, %v226, %v187
    %vm229 = vcmask 523264
    %v230 = vsel %vm229, %v228, 0
    %232 = vmatprep.subr.mxu0 0.0
    %233 = vmatpush1.msra.mxu0 0.0
    %234 = vmatprep.subr.mxu0 0.0
    %235 = vmatpush1.msra.mxu0 0.0
    %236 = vmatprep.subr.mxu0 0.0
    %237 = vmatpush1.msra.mxu0 0.0
    %238 = vmatprep.subr.mxu0 0.0
    %239 = vmatpush1.msra.mxu0 0.0
    %240 = vmatprep.subr.mxu0 0.0
    %241 = vmatpush1.msra.mxu0 0.0
    %242 = vmatprep.subr.mxu0 0.0
    %243 = vmatpush1.msra.mxu0 0.0
    %244 = vmatprep.subr.mxu0 0.0
    %245 = vmatpush1.msra.mxu0 0.0
    %246 = vmatprep.subr.mxu0 0.0
    %247 = vmatpush1.msra.mxu0 0.0
    %248 = vmatprep.subr.mxu0 0.0
    %249 = vmatpush1.msra.mxu0 %v116
    %250 = vmatprep.subr.mxu0 0.0
    %251 = vmatpush1.msra.mxu0 %v115
    %252 = vmatprep.subr.mxu0 0.0
    %253 = vmatpush1.msra.mxu0 %v114
    %254 = vmatprep.subr.mxu0 0.0
    %255 = vmatpush1.msra.mxu0 %v113
    %256 = vmatprep.subr.mxu0 0.0
    %257 = vmatpush1.msra.mxu0 %v112
    %258 = vmatprep.subr.mxu0 0.0
    %259 = vmatpush1.msra.mxu0 %v111
    %260 = vmatprep.subr.mxu0 0.0
    %261 = vmatpush1.msra.mxu0 %v110
    %262 = vmatprep.subr.mxu0 0.0
    %263 = vmatpush1.msra.mxu0 %v109
    %264 = vmatprep.subr.mxu0 0.0
    %265 = vmatpush2.msra.mxu0 0.0
    %266 = vmatprep.subr.mxu0 0.0
    %267 = vmatpush2.msra.mxu0 0.0
    %268 = vmatprep.subr.mxu0 0.0
    %269 = vmatpush2.msra.mxu0 0.0
    %270 = vmatprep.subr.mxu0 0.0
    %271 = vmatpush2.msra.mxu0 0.0
    %272 = vmatprep.subr.mxu0 0.0
    %273 = vmatpush2.msra.mxu0 0.0
    %274 = vmatprep.subr.mxu0 0.0
    %275 = vmatpush2.msra.mxu0 0.0
    %276 = vmatprep.subr.mxu0 0.0
    %277 = vmatpush2.msra.mxu0 0.0
    %278 = vmatprep.subr.mxu0 0.0
    %279 = vmatpush2.msra.mxu0 0.0
    %280 = vmatprep.subr.mxu0 0.0
    %281 = vmatpush2.msra.mxu0 0.0
    %282 = vmatprep.subr.mxu0 0.0
    %283 = vmatpush2.msra.mxu0 0.0
    %284 = vmatprep.subr.mxu0 0.0
    %285 = vmatpush2.msra.mxu0 0.0
    %286 = vmatprep.subr.mxu0 0.0
    %287 = vmatpush2.msra.mxu0 0.0
    %288 = vmatprep.subr.mxu0 0.0
    %289 = vmatpush2.msra.mxu0 0.0
    %290 = vmatprep.subr.mxu0 0.0
    %291 = vmatpush2.msra.mxu0 0.0
    %292 = vmatprep.subr.mxu0 0.0
    %293 = vmatpush2.msra.mxu0 0.0
    %294 = vmatprep.subr.mxu0 0.0
    %295 = vmatpush2.msra.mxu0 0.0
    %296 = vmatprep.mubr.f32.mxu0 0.0
    %297 = vmatmul.mubr.f32.gmra.mxu0 %v230
    %v298 = vpop.f32.mrf.mxu0
    %v299 = vadd.f32 0.0, %v298
    %v300 = vpop.f32.mrf.mxu0
    %301 = vdwg.mxu0
    %v302 = vmax.f32 %v299, 0.0
    %v303 = vld [vmem:[%s2] sm:$0xf]
    %vm304 = vcmask 31744
    %v306 = vsel %vm304, %v302, 0
    %vm308 = vcmask 1043456
    %v310 = vsel %vm308, %v303, 0
    %312 = vmatprep.subr.mxu0 0.0
    %313 = vmatpush1.msra.mxu0 0.0
    %314 = vmatprep.subr.mxu0 0.0
    %315 = vmatpush1.msra.mxu0 0.0
    %316 = vmatprep.subr.mxu0 0.0
    %317 = vmatpush1.msra.mxu0 0.0
    %318 = vmatprep.subr.mxu0 0.0
    %319 = vmatpush1.msra.mxu0 0.0
    %320 = vmatprep.subr.mxu0 0.0
    %321 = vmatpush1.msra.mxu0 0.0
    %322 = vmatprep.subr.mxu0 0.0
    %323 = vmatpush1.msra.mxu0 0.0
    %324 = vmatprep.subr.mxu0 0.0
    %325 = vmatpush1.msra.mxu0 0.0
    %326 = vmatprep.subr.mxu0 0.0
    %327 = vmatpush1.msra.mxu0 0.0
    %328 = vmatprep.subr.mxu0 0.0
    %329 = vmatpush1.msra.mxu0 0.0
    %330 = vmatprep.subr.mxu0 0.0
    %331 = vmatpush1.msra.mxu0 0.0
    %332 = vmatprep.subr.mxu0 0.0
    %333 = vmatpush1.msra.mxu0 0.0
    %334 = vmatprep.subr.mxu0 0.0
    %335 = vmatpush1.msra.mxu0 0.0
    %336 = vmatprep.subr.mxu0 0.0
    %337 = vmatpush1.msra.mxu0 0.0
    %338 = vmatprep.subr.mxu0 0.0
    %339 = vmatpush1.msra.mxu0 0.0
    %340 = vmatprep.subr.mxu0 0.0
    %341 = vmatpush1.msra.mxu0 0.0
    %342 = vmatprep.subr.mxu0 0.0
    %343 = vmatpush1.msra.mxu0 %v310
    %344 = vmatprep.subr.mxu0 0.0
    %345 = vmatpush2.msra.mxu0 0.0
    %346 = vmatprep.subr.mxu0 0.0
    %347 = vmatpush2.msra.mxu0 0.0
    %348 = vmatprep.subr.mxu0 0.0
    %349 = vmatpush2.msra.mxu0 0.0
    %350 = vmatprep.subr.mxu0 0.0
    %351 = vmatpush2.msra.mxu0 0.0
    %352 = vmatprep.subr.mxu0 0.0
    %353 = vmatpush2.msra.mxu0 0.0
    %354 = vmatprep.subr.mxu0 0.0
    %355 = vmatpush2.msra.mxu0 0.0
    %356 = vmatprep.subr.mxu0 0.0
    %357 = vmatpush2.msra.mxu0 0.0
    %358 = vmatprep.subr.mxu0 0.0
    %359 = vmatpush2.msra.mxu0 0.0
    %360 = vmatprep.subr.mxu0 0.0
    %361 = vmatpush2.msra.mxu0 0.0
    %362 = vmatprep.subr.mxu0 0.0
    %363 = vmatpush2.msra.mxu0 0.0
    %364 = vmatprep.subr.mxu0 0.0
    %365 = vmatpush2.msra.mxu0 0.0
    %366 = vmatprep.subr.mxu0 0.0
    %367 = vmatpush2.msra.mxu0 0.0
    %368 = vmatprep.subr.mxu0 0.0
    %369 = vmatpush2.msra.mxu0 0.0
    %370 = vmatprep.subr.mxu0 0.0
    %371 = vmatpush2.msra.mxu0 0.0
    %372 = vmatprep.subr.mxu0 0.0
    %373 = vmatpush2.msra.mxu0 0.0
    %374 = vmatprep.subr.mxu0 0.0
    %375 = vmatpush2.msra.mxu0 0.0
    %376 = vmatprep.mubr.f32.mxu0 0.0
    %377 = vmatmul.mubr.f32.gmra.mxu0 %v306
    %v378 = vpop.f32.mrf.mxu0
    %v379 = vadd.f32 0.0, %v378
    %v380 = vpop.f32.mrf.mxu0
    %381 = vdwg.mxu0
    %v382 = vxor.u32 %v379, 2147483648
    %v383 = vmul.f32 %v382, 1.442695
    %v384 = vpow.pop %v383
    %v385 = vadd.f32 %v384, 1.0
    %v386 = vrcp.pop %v385
    %v387 = vmul.f32 1.0, %v386
    %v388 = vlaneseq
    %v389 = vshrl.u32 %v388, 7
    %v390 = vsub.s32 0, %v389
    %v391 = vrot.slane %v387, %v390
    %393 = vbcast.lane.b32.xlu0 %v391, 256
    %v394 = vpop.permute.xlu0 %393
    %s396 = sor.u32 256, 8
    %397 = vbcast.lane.b32.xlu0 %v391, %s396
    %v398 = vpop.permute.xlu0 %397
    %s400 = sor.u32 256, 16
    %401 = vbcast.lane.b32.xlu0 %v391, %s400
    %v402 = vpop.permute.xlu0 %401
    %s404 = sor.u32 256, 24
    %405 = vbcast.lane.b32.xlu0 %v391, %s404
    %v406 = vpop.permute.xlu0 %405
    %s408 = sor.u32 256, 32
    %409 = vbcast.lane.b32.xlu0 %v391, %s408
    %v410 = vpop.permute.xlu0 %409
    %s412 = sor.u32 256, 40
    %413 = vbcast.lane.b32.xlu0 %v391, %s412
    %v414 = vpop.permute.xlu0 %413
    %s416 = sor.u32 256, 48
    %417 = vbcast.lane.b32.xlu0 %v391, %s416
    %v418 = vpop.permute.xlu0 %417
    %s420 = sor.u32 256, 56
    %421 = vbcast.lane.b32.xlu0 %v391, %s420
    %v422 = vpop.permute.xlu0 %421
    %v423 = vlaneseq
    %v424 = vshrl.u32 %v423, 7
    %v425 = vsub.s32 1, %v424
    %v426 = vrot.slane %v387, %v425
    %428 = vbcast.lane.b32.xlu0 %v426, 256
    %v429 = vpop.permute.xlu0 %428
    %s431 = sor.u32 256, 8
    %432 = vbcast.lane.b32.xlu0 %v426, %s431
    %v433 = vpop.permute.xlu0 %432
    %s435 = sor.u32 256, 16
    %436 = vbcast.lane.b32.xlu0 %v426, %s435
    %v437 = vpop.permute.xlu0 %436
    %s439 = sor.u32 256, 24
    %440 = vbcast.lane.b32.xlu0 %v426, %s439
    %v441 = vpop.permute.xlu0 %440
    %s443 = sor.u32 256, 32
    %444 = vbcast.lane.b32.xlu0 %v426, %s443
    %v445 = vpop.permute.xlu0 %444
    %s447 = sor.u32 256, 40
    %448 = vbcast.lane.b32.xlu0 %v426, %s447
    %v449 = vpop.permute.xlu0 %448
    %s451 = sor.u32 256, 48
    %452 = vbcast.lane.b32.xlu0 %v426, %s451
    %v453 = vpop.permute.xlu0 %452
    %s455 = sor.u32 256, 56
    %456 = vbcast.lane.b32.xlu0 %v426, %s455
    %v457 = vpop.permute.xlu0 %456
    %v458 = vmul.f32 %v29, %v394
    %v459 = vmul.f32 %v30, %v394
    %v460 = vmul.f32 %v31, %v398
    %v461 = vmul.f32 %v32, %v398
    %v462 = vmul.f32 %v33, %v402
    %v463 = vmul.f32 %v34, %v402
    %v464 = vmul.f32 %v35, %v406
    %v465 = vmul.f32 %v36, %v406
    %v466 = vmul.f32 %v37, %v410
    %v467 = vmul.f32 %v38, %v410
    %v468 = vmul.f32 %v39, %v414
    %v469 = vmul.f32 %v40, %v414
    %v470 = vmul.f32 %v41, %v418
    %v471 = vmul.f32 %v42, %v418
    %v472 = vmul.f32 %v43, %v422
    %v473 = vmul.f32 %v44, %v422
    %v474 = vmul.f32 %v45, %v429
    %v475 = vmul.f32 %v46, %v429
    %v476 = vmul.f32 %v47, %v433
    %v477 = vmul.f32 %v48, %v433
    %v478 = vmul.f32 %v49, %v437
    %v479 = vmul.f32 %v50, %v437
    %v480 = vmul.f32 %v51, %v441
    %v481 = vmul.f32 %v52, %v441
    %v482 = vmul.f32 %v53, %v445
    %v483 = vmul.f32 %v54, %v445
    %v484 = vmul.f32 %v55, %v449
    %v485 = vmul.f32 %v56, %v449
    %v486 = vmul.f32 %v57, %v453
    %v487 = vmul.f32 %v58, %v453
    %v488 = vmul.f32 %v59, %v457
    %v489 = vmul.f32 %v60, %v457
    %490 = vst [vmem:[#allocation5] sm:$0xff] %v458
    %491 = vst [vmem:[#allocation5 + $0x8] sm:$0xff] %v459
    %492 = vst [vmem:[#allocation5 + $0x10] sm:$0xff] %v460
    %493 = vst [vmem:[#allocation5 + $0x18] sm:$0xff] %v461
    %494 = vst [vmem:[#allocation5 + $0x20] sm:$0xff] %v462
    %495 = vst [vmem:[#allocation5 + $0x28] sm:$0xff] %v463
    %496 = vst [vmem:[#allocation5 + $0x30] sm:$0xff] %v464
    %497 = vst [vmem:[#allocation5 + $0x38] sm:$0xff] %v465
    %498 = vst [vmem:[#allocation5 + $0x40] sm:$0xff] %v466
    %499 = vst [vmem:[#allocation5 + $0x48] sm:$0xff] %v467
    %500 = vst [vmem:[#allocation5 + $0x50] sm:$0xff] %v468
    %501 = vst [vmem:[#allocation5 + $0x58] sm:$0xff] %v469
    %502 = vst [vmem:[#allocation5 + $0x60] sm:$0xff] %v470
    %503 = vst [vmem:[#allocation5 + $0x68] sm:$0xff] %v471
    %504 = vst [vmem:[#allocation5 + $0x70] sm:$0xff] %v472
    %505 = vst [vmem:[#allocation5 + $0x78] sm:$0xff] %v473
    %506 = vst [vmem:[#allocation5 + $0x80] sm:$0xff] %v474
    %507 = vst [vmem:[#allocation5 + $0x88] sm:$0xff] %v475
    %508 = vst [vmem:[#allocation5 + $0x90] sm:$0xff] %v476
    %509 = vst [vmem:[#allocation5 + $0x98] sm:$0xff] %v477
    %510 = vst [vmem:[#allocation5 + $0xa0] sm:$0xff] %v478
    %511 = vst [vmem:[#allocation5 + $0xa8] sm:$0xff] %v479
    %512 = vst [vmem:[#allocation5 + $0xb0] sm:$0xff] %v480
    %513 = vst [vmem:[#allocation5 + $0xb8] sm:$0xff] %v481
    %514 = vst [vmem:[#allocation5 + $0xc0] sm:$0xff] %v482
    %515 = vst [vmem:[#allocation5 + $0xc8] sm:$0xff] %v483
    %516 = vst [vmem:[#allocation5 + $0xd0] sm:$0xff] %v484
    %517 = vst [vmem:[#allocation5 + $0xd8] sm:$0xff] %v485
    %518 = vst [vmem:[#allocation5 + $0xe0] sm:$0xff] %v486
    %519 = vst [vmem:[#allocation5 + $0xe8] sm:$0xff] %v487
    %520 = vst [vmem:[#allocation5 + $0xf0] sm:$0xff] %v488
    %521 = vst [vmem:[#allocation5 + $0xf8] sm:$0xff] %v489
    // Predicated region
    $region18: #{tpu_custom_call.1} parent=1 // pred_check
      _
    $region19: #{tpu_custom_call.1} parent=1 // pred_check_branch
      %523 = sbr.rel (0) target = $region21
    $region20: #{tpu_custom_call.1} parent=1 // pred_region
      %s525 = ssub.s32 4096, 4096
      %526 = vsyncadd [#allocation4], %s525
      %s527 = sshll.u32 [#allocation5], 4
      %s528 = int_to_ptr.vmem [resolvable:$true] %s527
      %533 = dma.vmem_to_hbm [thread:$0]  %s528, 4096, %s3, [#allocation4], 256, 256, 16
    $region21: #{tpu_custom_call.1} parent=1 // pred_fallthru
      _
    // Predicated region
    $region22: #{tpu_custom_call.1} parent=1 // pred_check
      _
    $region23: #{tpu_custom_call.1} parent=1 // pred_check_branch
      %535 = sbr.rel (0) target = $region25
    $region24: #{tpu_custom_call.1} parent=1 // pred_region
      %536 = dma.done [#allocation4], 4096
    $region25: #{tpu_custom_call.1} parent=1 // pred_fallthru
      _
    %537 = vsyncpa [#allocation3], 1
    %538 = vsyncpa [#allocation4], 1

</llo_original>
